<compile_context>
chip_gen: v7x
topology: tpu7x:2x2x1
jax: 0.10.0
libtpu: 0.0.40
codegen_flags: <defaults>
</compile_context>

<pallas_src>
import functools

import jax
import jax.numpy as jnp
from jax import lax
from jax.experimental import pallas as pl
from jax.experimental.pallas import tpu as pltpu


@functools.lru_cache(maxsize=1)
def _tpu_generation_params():
    """(vmem_budget_bytes, vmem_limit_bytes, max_b_block), generation-aware.

    v5e/v6e: 128 MiB physical VMEM -> ~96 MiB double-buffered input budget,
    110 MiB scoped limit, larger max batch block.  v7x (64 MiB per TC) or an
    unidentifiable chip -> conservative 24 MiB budget / 32 MiB limit, which
    leaves headroom for 2 inputs x 2 buffers + accumulator + output.
    """
    phys = 0
    try:
        phys = int(pltpu.get_tpu_info().vmem_capacity_bytes)
    except Exception:
        phys = 0
    if phys >= 128 * 1024 * 1024:
        return 96 * 1024 * 1024, 110 * 1024 * 1024, 2048
    return 24 * 1024 * 1024, 32 * 1024 * 1024, 512


def _single_step_kernel(x_ref, c_ref, o_ref):
    """Whole n-reduction in one shot: o = x_tile @ C."""
    o_ref[...] = jnp.dot(
        x_ref[...], c_ref[...], preferred_element_type=jnp.float32
    ).astype(o_ref.dtype)


def _make_reduction_kernel(tile_n, rem):
    """Tiled reduction over n (grid axis 1, 'arbitrary').

    `rem` (static) is n % tile_n.  When nonzero, the last tile's out-of-range
    columns of x / rows of C are out-of-bounds garbage reads; they are zeroed
    in-kernel (cheap VPU ops, hidden under the tile DMA) instead of padding
    the inputs in HBM.
    """

    def kernel(x_ref, c_ref, o_ref, acc_ref):
        kstep = pl.program_id(1)

        @pl.when(kstep == 0)
        def _():
            acc_ref[...] = jnp.zeros_like(acc_ref)

        x = x_ref[...]
        c = c_ref[...]
        if rem:
            is_last = kstep == pl.num_programs(1) - 1
            limit = jnp.where(is_last, rem, tile_n)
            col = lax.broadcasted_iota(jnp.int32, x.shape, 1)
            x = jnp.where(col < limit, x, 0.0)
            row = lax.broadcasted_iota(jnp.int32, c.shape, 0)
            c = jnp.where(row < limit, c, 0.0)

        acc_ref[...] += jnp.dot(x, c, preferred_element_type=jnp.float32)

        @pl.when(kstep == pl.num_programs(1) - 1)
        def _():
            o_ref[...] = acc_ref[...].astype(o_ref.dtype)

    return kernel


def _pick_tile_n(block_b, n, k, itemsize, budget):
    """Largest reduction tile fitting the (double-buffered) VMEM budget."""
    if 2 * (block_b * n + n * k) * itemsize <= budget:
        return n  # single-shot: whole reduction in one grid step
    tn = budget // (2 * (block_b + k) * itemsize)
    tn = max(128, (tn // 128) * 128)  # lane-aligned
    return min(tn, n)


def _pick_block_b(B, max_b_block):
    """Batch block: full B when small; split so nb >= 2 once B is large.

    Keeping >= 2 batch blocks lets v7x's two TensorCores both stream from HBM
    via the 'parallel' batch axis; on single-core v5e/v6e the extra grid step
    (~0.35 us) is negligible for such B.
    """
    if B > max_b_block:
        return max_b_block
    if B >= 256:
        return min(B, ((pl.cdiv(B, 2) + 7) // 8) * 8)
    return B


@functools.partial(jax.jit, static_argnames=("tile_n",))
def categories_forward(x, c_mat, *, tile_n=None):
    """JAX/Pallas equivalent of CategoriesModule.forward.

    x:     (B, ...) float32; trailing dims flatten (row-major, like .view) to n
    c_mat: (n, k) float32
    returns: (B, k) float32
    """
    B = x.shape[0]
    x_flat = x.reshape(B, -1)
    n = x_flat.shape[1]
    n_c, k = c_mat.shape
    assert n_c == n, "C_mat row count must equal flattened feature size"

    itemsize = x_flat.dtype.itemsize
    budget, vmem_limit, max_b_block = _tpu_generation_params()

    block_b = _pick_block_b(B, max_b_block)
    nb = pl.cdiv(B, block_b)
    # NOTE: if B % block_b != 0, the last batch block reads garbage rows of x,
    # but those rows only feed output rows that Pallas drops on writeback, so
    # results stay correct.  Do NOT rely on this for the reduction (n) axis --
    # there the ragged tile is explicitly masked in-kernel below.

    if tile_n is None:
        tile_n = _pick_tile_n(block_b, n, k, itemsize, budget)

    cost = pl.CostEstimate(
        flops=2 * B * n * k,
        transcendentals=0,
        bytes_accessed=(B * n + n * k + B * k) * itemsize,
    )
    cparams_kwargs = dict(vmem_limit_bytes=vmem_limit)

    if tile_n >= n:
        # -------- single reduction step per batch block (default path) ------
        return pl.pallas_call(
            _single_step_kernel,
            out_shape=jax.ShapeDtypeStruct((B, k), x_flat.dtype),
            grid=(nb,),
            in_specs=[
                pl.BlockSpec((block_b, n), lambda b: (b, 0)),
                pl.BlockSpec((n, k), lambda b: (0, 0)),
            ],
            out_specs=pl.BlockSpec((block_b, k), lambda b: (b, 0)),
            compiler_params=pltpu.CompilerParams(
                dimension_semantics=("parallel",), **cparams_kwargs
            ),
            cost_estimate=cost,
        )(x_flat, c_mat)

    # ---------------- tiled reduction over n (large-n path) -----------------
    assert tile_n % 128 == 0, "tile_n must be a multiple of 128 (lane width)"
    n_steps = pl.cdiv(n, tile_n)
    rem = n % tile_n  # static; 0 -> evenly divisible, no in-kernel masking

    return pl.pallas_call(
        _make_reduction_kernel(tile_n, rem),
        out_shape=jax.ShapeDtypeStruct((B, k), x_flat.dtype),
        grid=(nb, n_steps),
        in_specs=[
            pl.BlockSpec((block_b, tile_n), lambda b, s: (b, s)),
            pl.BlockSpec((tile_n, k), lambda b, s: (s, 0)),
        ],
        out_specs=pl.BlockSpec((block_b, k), lambda b, s: (b, 0)),
        scratch_shapes=[pltpu.VMEM((block_b, k), jnp.float32)],
        compiler_params=pltpu.CompilerParams(
            dimension_semantics=("parallel", "arbitrary"), **cparams_kwargs
        ),
        cost_estimate=cost,
    )(x_flat, c_mat)


if __name__ == "__main__":
    # Shapes consistent with the module defaults: n = 3072 = 3*32*32, k = 3.
    B, C, H, W = 2, 3, 32, 32
    n = C * H * W
    k = 3

    key = jax.random.PRNGKey(0)
    kx, kc = jax.random.split(key)

    x = jax.random.normal(kx, (B, C, H, W), dtype=jnp.float32)
    # Deterministic parameter init mirroring torch.randn(n, k) * 0.001
    c_mat = 0.001 * jax.random.normal(kc, (n, k), dtype=jnp.float32)

    ref = x.reshape(B, -1) @ c_mat

    # Default path: whole reduction in one grid step (grid=(1,)).
    out = jax.block_until_ready(categories_forward(x, c_mat))
    assert out.shape == (B, k)
    assert jnp.allclose(out, ref, atol=1e-5, rtol=1e-5)

    # Tiled-reduction path, evenly divisible n (rem == 0, no masking).
    out_tiled = jax.block_until_ready(categories_forward(x, c_mat, tile_n=1024))
    assert jnp.allclose(out_tiled, ref, atol=1e-5, rtol=1e-5)

    # Tiled-reduction path with a ragged last tile -> in-kernel mask, no pad.
    out_ragged = jax.block_until_ready(categories_forward(x, c_mat, tile_n=1280))
    assert jnp.allclose(out_ragged, ref, atol=1e-5, rtol=1e-5)

    # Large-B path: batch axis splits into >= 2 "parallel" blocks (v7x 2-TC).
    B2 = 272
    x2 = jax.random.normal(kx, (B2, C, H, W), dtype=jnp.float32)
    ref2 = x2.reshape(B2, -1) @ c_mat
    out2 = jax.block_until_ready(categories_forward(x2, c_mat))
    assert out2.shape == (B2, k)
    assert jnp.allclose(out2, ref2, atol=1e-5, rtol=1e-5)

    print("KERNEL_OK")
</pallas_src>

<mosaic_0001>
module attributes {stable_mosaic.version = 11 : i64} {
  func.func @_single_step_kernel(%arg0: i32, %arg1: memref<2x3072xf32, #tpu.memory_space<vmem>>, %arg2: memref<3072x3xf32, #tpu.memory_space<vmem>>, %arg3: memref<2x3xf32, #tpu.memory_space<vmem>>) attributes {dimension_semantics = [#tpu.dimension_semantics<parallel>], iteration_bounds = array<i64: 1>, scalar_prefetch = 0 : i64, scratch_operands = 0 : i64, tpu.core_type = #tpu.core_type<tc>, window_params = [{transform_indices = @transform_0, window_bounds = array<i64: 2, 3072>}, {pipeline_mode = #tpu.pipeline_mode<synchronous>, transform_indices = @transform_1, window_bounds = array<i64: 3072, 3>}, {transform_indices = @transform_2, window_bounds = array<i64: 2, 3>}]} {
    %c0 = arith.constant 0 : index
    %c0_0 = arith.constant 0 : index
    %0 = vector.load %arg1[%c0, %c0_0] : memref<2x3072xf32, #tpu.memory_space<vmem>>, vector<2x3072xf32>
    %c0_1 = arith.constant 0 : index
    %c0_2 = arith.constant 0 : index
    %1 = vector.load %arg2[%c0_1, %c0_2] : memref<3072x3xf32, #tpu.memory_space<vmem>>, vector<3072x3xf32>
    %cst = arith.constant dense<0.000000e+00> : vector<2x3xf32>
    %2 = tpu.matmul %0, %1, %cst {dimension_numbers = #tpu.dot_dimension_numbers<[1], [0], [0], [1], [0, 0, 1, 1], [], []>} : vector<2x3072xf32>, vector<3072x3xf32>, vector<2x3xf32> -> vector<2x3xf32>
    %c0_3 = arith.constant 0 : index
    %c0_4 = arith.constant 0 : index
    %3 = vector.load %arg3[%c0_3, %c0_4] : memref<2x3xf32, #tpu.memory_space<vmem>>, vector<2x3xf32>
    tpu.vector_store %arg3[%c0_3, %c0_4], %2 {strides = array<i32>} : memref<2x3xf32, #tpu.memory_space<vmem>>, vector<2x3xf32>,
    return
  }
  func.func @transform_0(%arg0: i32) -> (i32, i32) {
    %c0_i32 = arith.constant 0 : i32
    %c0_i32_0 = arith.constant 0 : i32
    return %arg0, %c0_i32 : i32, i32
  }
  func.func @transform_1(%arg0: i32) -> (i32, i32) {
    %c0_i32 = arith.constant 0 : i32
    %c0_i32_0 = arith.constant 0 : i32
    %c0_i32_1 = arith.constant 0 : i32
    return %c0_i32, %c0_i32_0 : i32, i32
  }
  func.func @transform_2(%arg0: i32) -> (i32, i32) {
    %c0_i32 = arith.constant 0 : i32
    %c0_i32_0 = arith.constant 0 : i32
    return %arg0, %c0_i32 : i32, i32
  }
}

</mosaic_0001>

<llo_original>
// kernel: categories_forward.1
$region0: #{categories_forward.1}
  #allocation0 [shape = 'u32[]', space=smem, size = 0x4, offset = 0x4, fixed_abs, tag = 'smem constant byte address 0x4 - core index']
  #allocation1 [shape = 'u32[144,128]{1,0:T(1,128)}', space=vmem, size = 0x12000, scoped, tag = 'internal scratch']
  %s0 = inlined_call_operand.vmem [shape: f32[2,3072], index: 0, kind: input, shape index: {}]
  %s1 = inlined_call_operand.vmem [shape: f32[3072,3], index: 1, kind: input, shape index: {}]
  %s2 = inlined_call_operand.hbm [shape: f32[2,3], index: 2, kind: output, shape index: {}]
  %s3 = sld [smem:[#allocation0]]
  $region18: #{categories_forward.1} parent=0
    _
  %s5 = ssub.s32 1, %s3
  %s6 = scalar_select 0, %s5, %s3
  $region1: #{categories_forward.1} parent=0
    #allocation2 [shape = 'u8[1024]{0}', space=vmem, size = 0x400, scoped, tag = 'output window, operand 0, single buffered']
    #allocation3 [shape = 's32[1]{0}', space=sflag, size = 0x4, scoped, tag = 'scoped memory for categories_forward.1']
    %7 = vsyncpa [#allocation3], 0
    // Predicated region
    $region2: #{categories_forward.1} parent=1 // pred_check
      _
    $region3: #{categories_forward.1} parent=1 // pred_check_branch
      %9 = sbr.rel (0) target = $region5
    $region4: #{categories_forward.1} parent=1 // pred_region
      _
    $region5: #{categories_forward.1} parent=1 // pred_fallthru
      _
    // Predicated region
    $region6: #{categories_forward.1} parent=1 // pred_check
      _
    $region7: #{categories_forward.1} parent=1 // pred_check_branch
      %11 = sbr.rel (0) target = $region9
    $region8: #{categories_forward.1} parent=1 // pred_region
      _
    $region9: #{categories_forward.1} parent=1 // pred_fallthru
      _
    %v12 = vld [vmem:[%s0] sm:$0xff]
    %v13 = vld [vmem:[%s0 + $0x8] sm:$0xff]
    %v14 = vld [vmem:[%s0 + $0x10] sm:$0xff]
    %v15 = vld [vmem:[%s0 + $0x18] sm:$0xff]
    %v16 = vld [vmem:[%s0 + $0x20] sm:$0xff]
    %v17 = vld [vmem:[%s0 + $0x28] sm:$0xff]
    %v18 = vld [vmem:[%s1] sm:$0xff]
    %v19 = vld [vmem:[%s1 + $0x8] sm:$0xff]
    %v20 = vld [vmem:[%s1 + $0x10] sm:$0xff]
    %v21 = vld [vmem:[%s1 + $0x18] sm:$0xff]
    %v22 = vld [vmem:[%s1 + $0x20] sm:$0xff]
    %v23 = vld [vmem:[%s1 + $0x28] sm:$0xff]
    %v24 = vld [vmem:[%s1 + $0x30] sm:$0xff]
    %v25 = vld [vmem:[%s1 + $0x38] sm:$0xff]
    %v26 = vld [vmem:[%s1 + $0x40] sm:$0xff]
    %v27 = vld [vmem:[%s1 + $0x48] sm:$0xff]
    %v28 = vld [vmem:[%s1 + $0x50] sm:$0xff]
    %v29 = vld [vmem:[%s1 + $0x58] sm:$0xff]
    %v30 = vld [vmem:[%s1 + $0x60] sm:$0xff]
    %v31 = vld [vmem:[%s1 + $0x68] sm:$0xff]
    %v32 = vld [vmem:[%s1 + $0x70] sm:$0xff]
    %v33 = vld [vmem:[%s1 + $0x78] sm:$0xff]
    %v34 = vld [vmem:[%s1 + $0x80] sm:$0xff]
    %v35 = vld [vmem:[%s1 + $0x88] sm:$0xff]
    %v36 = vld [vmem:[%s1 + $0x90] sm:$0xff]
    %v37 = vld [vmem:[%s1 + $0x98] sm:$0xff]
    %v38 = vld [vmem:[%s1 + $0xa0] sm:$0xff]
    %v39 = vld [vmem:[%s1 + $0xa8] sm:$0xff]
    %v40 = vld [vmem:[%s1 + $0xb0] sm:$0xff]
    %v41 = vld [vmem:[%s1 + $0xb8] sm:$0xff]
    %v42 = vld [vmem:[%s1 + $0xc0] sm:$0xff]
    %v43 = vld [vmem:[%s1 + $0xc8] sm:$0xff]
    %v44 = vld [vmem:[%s1 + $0xd0] sm:$0xff]
    %v45 = vld [vmem:[%s1 + $0xd8] sm:$0xff]
    %v46 = vld [vmem:[%s1 + $0xe0] sm:$0xff]
    %v47 = vld [vmem:[%s1 + $0xe8] sm:$0xff]
    %v48 = vld [vmem:[%s1 + $0xf0] sm:$0xff]
    %v49 = vld [vmem:[%s1 + $0xf8] sm:$0xff]
    %v50 = vld [vmem:[%s1 + $0x100] sm:$0xff]
    %v51 = vld [vmem:[%s1 + $0x108] sm:$0xff]
    %v52 = vld [vmem:[%s1 + $0x110] sm:$0xff]
    %v53 = vld [vmem:[%s1 + $0x118] sm:$0xff]
    %v54 = vld [vmem:[%s1 + $0x120] sm:$0xff]
    %v55 = vld [vmem:[%s1 + $0x128] sm:$0xff]
    %v56 = vld [vmem:[%s1 + $0x130] sm:$0xff]
    %v57 = vld [vmem:[%s1 + $0x138] sm:$0xff]
    %v58 = vld [vmem:[%s1 + $0x140] sm:$0xff]
    %v59 = vld [vmem:[%s1 + $0x148] sm:$0xff]
    %v60 = vld [vmem:[%s1 + $0x150] sm:$0xff]
    %v61 = vld [vmem:[%s1 + $0x158] sm:$0xff]
    %v62 = vld [vmem:[%s1 + $0x160] sm:$0xff]
    %v63 = vld [vmem:[%s1 + $0x168] sm:$0xff]
    %v64 = vld [vmem:[%s1 + $0x170] sm:$0xff]
    %v65 = vld [vmem:[%s1 + $0x178] sm:$0xff]
    %v66 = vld [vmem:[%s1 + $0x180] sm:$0xff]
    %v67 = vld [vmem:[%s1 + $0x188] sm:$0xff]
    %v68 = vld [vmem:[%s1 + $0x190] sm:$0xff]
    %v69 = vld [vmem:[%s1 + $0x198] sm:$0xff]
    %v70 = vld [vmem:[%s1 + $0x1a0] sm:$0xff]
    %v71 = vld [vmem:[%s1 + $0x1a8] sm:$0xff]
    %v72 = vld [vmem:[%s1 + $0x1b0] sm:$0xff]
    %v73 = vld [vmem:[%s1 + $0x1b8] sm:$0xff]
    %v74 = vld [vmem:[%s1 + $0x1c0] sm:$0xff]
    %v75 = vld [vmem:[%s1 + $0x1c8] sm:$0xff]
    %v76 = vld [vmem:[%s1 + $0x1d0] sm:$0xff]
    %v77 = vld [vmem:[%s1 + $0x1d8] sm:$0xff]
    %v78 = vld [vmem:[%s1 + $0x1e0] sm:$0xff]
    %v79 = vld [vmem:[%s1 + $0x1e8] sm:$0xff]
    %v80 = vld [vmem:[%s1 + $0x1f0] sm:$0xff]
    %v81 = vld [vmem:[%s1 + $0x1f8] sm:$0xff]
    %v82 = vld [vmem:[%s1 + $0x200] sm:$0xff]
    %v83 = vld [vmem:[%s1 + $0x208] sm:$0xff]
    %v84 = vld [vmem:[%s1 + $0x210] sm:$0xff]
    %v85 = vld [vmem:[%s1 + $0x218] sm:$0xff]
    %v86 = vld [vmem:[%s1 + $0x220] sm:$0xff]
    %v87 = vld [vmem:[%s1 + $0x228] sm:$0xff]
    %v88 = vld [vmem:[%s1 + $0x230] sm:$0xff]
    %v89 = vld [vmem:[%s1 + $0x238] sm:$0xff]
    %v90 = vld [vmem:[%s1 + $0x240] sm:$0xff]
    %v91 = vld [vmem:[%s1 + $0x248] sm:$0xff]
    %v92 = vld [vmem:[%s1 + $0x250] sm:$0xff]
    %v93 = vld [vmem:[%s1 + $0x258] sm:$0xff]
    %v94 = vld [vmem:[%s1 + $0x260] sm:$0xff]
    %v95 = vld [vmem:[%s1 + $0x268] sm:$0xff]
    %v96 = vld [vmem:[%s1 + $0x270] sm:$0xff]
    %v97 = vld [vmem:[%s1 + $0x278] sm:$0xff]
    %v98 = vld [vmem:[%s1 + $0x280] sm:$0xff]
    %v99 = vld [vmem:[%s1 + $0x288] sm:$0xff]
    %v100 = vld [vmem:[%s1 + $0x290] sm:$0xff]
    %v101 = vld [vmem:[%s1 + $0x298] sm:$0xff]
    %v102 = vld [vmem:[%s1 + $0x2a0] sm:$0xff]
    %v103 = vld [vmem:[%s1 + $0x2a8] sm:$0xff]
    %v104 = vld [vmem:[%s1 + $0x2b0] sm:$0xff]
    %v105 = vld [vmem:[%s1 + $0x2b8] sm:$0xff]
    %v106 = vld [vmem:[%s1 + $0x2c0] sm:$0xff]
    %v107 = vld [vmem:[%s1 + $0x2c8] sm:$0xff]
    %v108 = vld [vmem:[%s1 + $0x2d0] sm:$0xff]
    %v109 = vld [vmem:[%s1 + $0x2d8] sm:$0xff]
    %v110 = vld [vmem:[%s1 + $0x2e0] sm:$0xff]
    %v111 = vld [vmem:[%s1 + $0x2e8] sm:$0xff]
    %v112 = vld [vmem:[%s1 + $0x2f0] sm:$0xff]
    %v113 = vld [vmem:[%s1 + $0x2f8] sm:$0xff]
    %v114 = vld [vmem:[%s1 + $0x300] sm:$0xff]
    %v115 = vld [vmem:[%s1 + $0x308] sm:$0xff]
    %v116 = vld [vmem:[%s1 + $0x310] sm:$0xff]
    %v117 = vld [vmem:[%s1 + $0x318] sm:$0xff]
    %v118 = vld [vmem:[%s1 + $0x320] sm:$0xff]
    %v119 = vld [vmem:[%s1 + $0x328] sm:$0xff]
    %v120 = vld [vmem:[%s1 + $0x330] sm:$0xff]
    %v121 = vld [vmem:[%s1 + $0x338] sm:$0xff]
    %v122 = vld [vmem:[%s1 + $0x340] sm:$0xff]
    %v123 = vld [vmem:[%s1 + $0x348] sm:$0xff]
    %v124 = vld [vmem:[%s1 + $0x350] sm:$0xff]
    %v125 = vld [vmem:[%s1 + $0x358] sm:$0xff]
    %v126 = vld [vmem:[%s1 + $0x360] sm:$0xff]
    %v127 = vld [vmem:[%s1 + $0x368] sm:$0xff]
    %v128 = vld [vmem:[%s1 + $0x370] sm:$0xff]
    %v129 = vld [vmem:[%s1 + $0x378] sm:$0xff]
    %v130 = vld [vmem:[%s1 + $0x380] sm:$0xff]
    %v131 = vld [vmem:[%s1 + $0x388] sm:$0xff]
    %v132 = vld [vmem:[%s1 + $0x390] sm:$0xff]
    %v133 = vld [vmem:[%s1 + $0x398] sm:$0xff]
    %v134 = vld [vmem:[%s1 + $0x3a0] sm:$0xff]
    %v135 = vld [vmem:[%s1 + $0x3a8] sm:$0xff]
    %v136 = vld [vmem:[%s1 + $0x3b0] sm:$0xff]
    %v137 = vld [vmem:[%s1 + $0x3b8] sm:$0xff]
    %v138 = vld [vmem:[%s1 + $0x3c0] sm:$0xff]
    %v139 = vld [vmem:[%s1 + $0x3c8] sm:$0xff]
    %v140 = vld [vmem:[%s1 + $0x3d0] sm:$0xff]
    %v141 = vld [vmem:[%s1 + $0x3d8] sm:$0xff]
    %v142 = vld [vmem:[%s1 + $0x3e0] sm:$0xff]
    %v143 = vld [vmem:[%s1 + $0x3e8] sm:$0xff]
    %v144 = vld [vmem:[%s1 + $0x3f0] sm:$0xff]
    %v145 = vld [vmem:[%s1 + $0x3f8] sm:$0xff]
    %v146 = vld [vmem:[%s1 + $0x400] sm:$0xff]
    %v147 = vld [vmem:[%s1 + $0x408] sm:$0xff]
    %v148 = vld [vmem:[%s1 + $0x410] sm:$0xff]
    %v149 = vld [vmem:[%s1 + $0x418] sm:$0xff]
    %v150 = vld [vmem:[%s1 + $0x420] sm:$0xff]
    %v151 = vld [vmem:[%s1 + $0x428] sm:$0xff]
    %v152 = vld [vmem:[%s1 + $0x430] sm:$0xff]
    %v153 = vld [vmem:[%s1 + $0x438] sm:$0xff]
    %v154 = vld [vmem:[%s1 + $0x440] sm:$0xff]
    %v155 = vld [vmem:[%s1 + $0x448] sm:$0xff]
    %v156 = vld [vmem:[%s1 + $0x450] sm:$0xff]
    %v157 = vld [vmem:[%s1 + $0x458] sm:$0xff]
    %v158 = vld [vmem:[%s1 + $0x460] sm:$0xff]
    %v159 = vld [vmem:[%s1 + $0x468] sm:$0xff]
    %v160 = vld [vmem:[%s1 + $0x470] sm:$0xff]
    %v161 = vld [vmem:[%s1 + $0x478] sm:$0xff]
    %v162 = vld [vmem:[%s1 + $0x480] sm:$0xff]
    %v163 = vld [vmem:[%s1 + $0x488] sm:$0xff]
    %v164 = vld [vmem:[%s1 + $0x490] sm:$0xff]
    %v165 = vld [vmem:[%s1 + $0x498] sm:$0xff]
    %v166 = vld [vmem:[%s1 + $0x4a0] sm:$0xff]
    %v167 = vld [vmem:[%s1 + $0x4a8] sm:$0xff]
    %v168 = vld [vmem:[%s1 + $0x4b0] sm:$0xff]
    %v169 = vld [vmem:[%s1 + $0x4b8] sm:$0xff]
    %v170 = vld [vmem:[%s1 + $0x4c0] sm:$0xff]
    %v171 = vld [vmem:[%s1 + $0x4c8] sm:$0xff]
    %v172 = vld [vmem:[%s1 + $0x4d0] sm:$0xff]
    %v173 = vld [vmem:[%s1 + $0x4d8] sm:$0xff]
    %v174 = vld [vmem:[%s1 + $0x4e0] sm:$0xff]
    %v175 = vld [vmem:[%s1 + $0x4e8] sm:$0xff]
    %v176 = vld [vmem:[%s1 + $0x4f0] sm:$0xff]
    %v177 = vld [vmem:[%s1 + $0x4f8] sm:$0xff]
    %v178 = vld [vmem:[%s1 + $0x500] sm:$0xff]
    %v179 = vld [vmem:[%s1 + $0x508] sm:$0xff]
    %v180 = vld [vmem:[%s1 + $0x510] sm:$0xff]
    %v181 = vld [vmem:[%s1 + $0x518] sm:$0xff]
    %v182 = vld [vmem:[%s1 + $0x520] sm:$0xff]
    %v183 = vld [vmem:[%s1 + $0x528] sm:$0xff]
    %v184 = vld [vmem:[%s1 + $0x530] sm:$0xff]
    %v185 = vld [vmem:[%s1 + $0x538] sm:$0xff]
    %v186 = vld [vmem:[%s1 + $0x540] sm:$0xff]
    %v187 = vld [vmem:[%s1 + $0x548] sm:$0xff]
    %v188 = vld [vmem:[%s1 + $0x550] sm:$0xff]
    %v189 = vld [vmem:[%s1 + $0x558] sm:$0xff]
    %v190 = vld [vmem:[%s1 + $0x560] sm:$0xff]
    %v191 = vld [vmem:[%s1 + $0x568] sm:$0xff]
    %v192 = vld [vmem:[%s1 + $0x570] sm:$0xff]
    %v193 = vld [vmem:[%s1 + $0x578] sm:$0xff]
    %v194 = vld [vmem:[%s1 + $0x580] sm:$0xff]
    %v195 = vld [vmem:[%s1 + $0x588] sm:$0xff]
    %v196 = vld [vmem:[%s1 + $0x590] sm:$0xff]
    %v197 = vld [vmem:[%s1 + $0x598] sm:$0xff]
    %v198 = vld [vmem:[%s1 + $0x5a0] sm:$0xff]
    %v199 = vld [vmem:[%s1 + $0x5a8] sm:$0xff]
    %v200 = vld [vmem:[%s1 + $0x5b0] sm:$0xff]
    %v201 = vld [vmem:[%s1 + $0x5b8] sm:$0xff]
    %v202 = vld [vmem:[%s1 + $0x5c0] sm:$0xff]
    %v203 = vld [vmem:[%s1 + $0x5c8] sm:$0xff]
    %v204 = vld [vmem:[%s1 + $0x5d0] sm:$0xff]
    %v205 = vld [vmem:[%s1 + $0x5d8] sm:$0xff]
    %v206 = vld [vmem:[%s1 + $0x5e0] sm:$0xff]
    %v207 = vld [vmem:[%s1 + $0x5e8] sm:$0xff]
    %v208 = vld [vmem:[%s1 + $0x5f0] sm:$0xff]
    %v209 = vld [vmem:[%s1 + $0x5f8] sm:$0xff]
    %v210 = vld [vmem:[%s1 + $0x600] sm:$0xff]
    %v211 = vld [vmem:[%s1 + $0x608] sm:$0xff]
    %v212 = vld [vmem:[%s1 + $0x610] sm:$0xff]
    %v213 = vld [vmem:[%s1 + $0x618] sm:$0xff]
    %v214 = vld [vmem:[%s1 + $0x620] sm:$0xff]
    %v215 = vld [vmem:[%s1 + $0x628] sm:$0xff]
    %v216 = vld [vmem:[%s1 + $0x630] sm:$0xff]
    %v217 = vld [vmem:[%s1 + $0x638] sm:$0xff]
    %v218 = vld [vmem:[%s1 + $0x640] sm:$0xff]
    %v219 = vld [vmem:[%s1 + $0x648] sm:$0xff]
    %v220 = vld [vmem:[%s1 + $0x650] sm:$0xff]
    %v221 = vld [vmem:[%s1 + $0x658] sm:$0xff]
    %v222 = vld [vmem:[%s1 + $0x660] sm:$0xff]
    %v223 = vld [vmem:[%s1 + $0x668] sm:$0xff]
    %v224 = vld [vmem:[%s1 + $0x670] sm:$0xff]
    %v225 = vld [vmem:[%s1 + $0x678] sm:$0xff]
    %v226 = vld [vmem:[%s1 + $0x680] sm:$0xff]
    %v227 = vld [vmem:[%s1 + $0x688] sm:$0xff]
    %v228 = vld [vmem:[%s1 + $0x690] sm:$0xff]
    %v229 = vld [vmem:[%s1 + $0x698] sm:$0xff]
    %v230 = vld [vmem:[%s1 + $0x6a0] sm:$0xff]
    %v231 = vld [vmem:[%s1 + $0x6a8] sm:$0xff]
    %v232 = vld [vmem:[%s1 + $0x6b0] sm:$0xff]
    %v233 = vld [vmem:[%s1 + $0x6b8] sm:$0xff]
    %v234 = vld [vmem:[%s1 + $0x6c0] sm:$0xff]
    %v235 = vld [vmem:[%s1 + $0x6c8] sm:$0xff]
    %v236 = vld [vmem:[%s1 + $0x6d0] sm:$0xff]
    %v237 = vld [vmem:[%s1 + $0x6d8] sm:$0xff]
    %v238 = vld [vmem:[%s1 + $0x6e0] sm:$0xff]
    %v239 = vld [vmem:[%s1 + $0x6e8] sm:$0xff]
    %v240 = vld [vmem:[%s1 + $0x6f0] sm:$0xff]
    %v241 = vld [vmem:[%s1 + $0x6f8] sm:$0xff]
    %v242 = vld [vmem:[%s1 + $0x700] sm:$0xff]
    %v243 = vld [vmem:[%s1 + $0x708] sm:$0xff]
    %v244 = vld [vmem:[%s1 + $0x710] sm:$0xff]
    %v245 = vld [vmem:[%s1 + $0x718] sm:$0xff]
    %v246 = vld [vmem:[%s1 + $0x720] sm:$0xff]
    %v247 = vld [vmem:[%s1 + $0x728] sm:$0xff]
    %v248 = vld [vmem:[%s1 + $0x730] sm:$0xff]
    %v249 = vld [vmem:[%s1 + $0x738] sm:$0xff]
    %v250 = vld [vmem:[%s1 + $0x740] sm:$0xff]
    %v251 = vld [vmem:[%s1 + $0x748] sm:$0xff]
    %v252 = vld [vmem:[%s1 + $0x750] sm:$0xff]
    %v253 = vld [vmem:[%s1 + $0x758] sm:$0xff]
    %v254 = vld [vmem:[%s1 + $0x760] sm:$0xff]
    %v255 = vld [vmem:[%s1 + $0x768] sm:$0xff]
    %v256 = vld [vmem:[%s1 + $0x770] sm:$0xff]
    %v257 = vld [vmem:[%s1 + $0x778] sm:$0xff]
    %v258 = vld [vmem:[%s1 + $0x780] sm:$0xff]
    %v259 = vld [vmem:[%s1 + $0x788] sm:$0xff]
    %v260 = vld [vmem:[%s1 + $0x790] sm:$0xff]
    %v261 = vld [vmem:[%s1 + $0x798] sm:$0xff]
    %v262 = vld [vmem:[%s1 + $0x7a0] sm:$0xff]
    %v263 = vld [vmem:[%s1 + $0x7a8] sm:$0xff]
    %v264 = vld [vmem:[%s1 + $0x7b0] sm:$0xff]
    %v265 = vld [vmem:[%s1 + $0x7b8] sm:$0xff]
    %v266 = vld [vmem:[%s1 + $0x7c0] sm:$0xff]
    %v267 = vld [vmem:[%s1 + $0x7c8] sm:$0xff]
    %v268 = vld [vmem:[%s1 + $0x7d0] sm:$0xff]
    %v269 = vld [vmem:[%s1 + $0x7d8] sm:$0xff]
    %v270 = vld [vmem:[%s1 + $0x7e0] sm:$0xff]
    %v271 = vld [vmem:[%s1 + $0x7e8] sm:$0xff]
    %v272 = vld [vmem:[%s1 + $0x7f0] sm:$0xff]
    %v273 = vld [vmem:[%s1 + $0x7f8] sm:$0xff]
    %v274 = vld [vmem:[%s1 + $0x800] sm:$0xff]
    %v275 = vld [vmem:[%s1 + $0x808] sm:$0xff]
    %v276 = vld [vmem:[%s1 + $0x810] sm:$0xff]
    %v277 = vld [vmem:[%s1 + $0x818] sm:$0xff]
    %v278 = vld [vmem:[%s1 + $0x820] sm:$0xff]
    %v279 = vld [vmem:[%s1 + $0x828] sm:$0xff]
    %v280 = vld [vmem:[%s1 + $0x830] sm:$0xff]
    %v281 = vld [vmem:[%s1 + $0x838] sm:$0xff]
    %v282 = vld [vmem:[%s1 + $0x840] sm:$0xff]
    %v283 = vld [vmem:[%s1 + $0x848] sm:$0xff]
    %v284 = vld [vmem:[%s1 + $0x850] sm:$0xff]
    %v285 = vld [vmem:[%s1 + $0x858] sm:$0xff]
    %v286 = vld [vmem:[%s1 + $0x860] sm:$0xff]
    %v287 = vld [vmem:[%s1 + $0x868] sm:$0xff]
    %v288 = vld [vmem:[%s1 + $0x870] sm:$0xff]
    %v289 = vld [vmem:[%s1 + $0x878] sm:$0xff]
    %v290 = vld [vmem:[%s1 + $0x880] sm:$0xff]
    %v291 = vld [vmem:[%s1 + $0x888] sm:$0xff]
    %v292 = vld [vmem:[%s1 + $0x890] sm:$0xff]
    %v293 = vld [vmem:[%s1 + $0x898] sm:$0xff]
    %v294 = vld [vmem:[%s1 + $0x8a0] sm:$0xff]
    %v295 = vld [vmem:[%s1 + $0x8a8] sm:$0xff]
    %v296 = vld [vmem:[%s1 + $0x8b0] sm:$0xff]
    %v297 = vld [vmem:[%s1 + $0x8b8] sm:$0xff]
    %v298 = vld [vmem:[%s1 + $0x8c0] sm:$0xff]
    %v299 = vld [vmem:[%s1 + $0x8c8] sm:$0xff]
    %v300 = vld [vmem:[%s1 + $0x8d0] sm:$0xff]
    %v301 = vld [vmem:[%s1 + $0x8d8] sm:$0xff]
    %v302 = vld [vmem:[%s1 + $0x8e0] sm:$0xff]
    %v303 = vld [vmem:[%s1 + $0x8e8] sm:$0xff]
    %v304 = vld [vmem:[%s1 + $0x8f0] sm:$0xff]
    %v305 = vld [vmem:[%s1 + $0x8f8] sm:$0xff]
    %v306 = vld [vmem:[%s1 + $0x900] sm:$0xff]
    %v307 = vld [vmem:[%s1 + $0x908] sm:$0xff]
    %v308 = vld [vmem:[%s1 + $0x910] sm:$0xff]
    %v309 = vld [vmem:[%s1 + $0x918] sm:$0xff]
    %v310 = vld [vmem:[%s1 + $0x920] sm:$0xff]
    %v311 = vld [vmem:[%s1 + $0x928] sm:$0xff]
    %v312 = vld [vmem:[%s1 + $0x930] sm:$0xff]
    %v313 = vld [vmem:[%s1 + $0x938] sm:$0xff]
    %v314 = vld [vmem:[%s1 + $0x940] sm:$0xff]
    %v315 = vld [vmem:[%s1 + $0x948] sm:$0xff]
    %v316 = vld [vmem:[%s1 + $0x950] sm:$0xff]
    %v317 = vld [vmem:[%s1 + $0x958] sm:$0xff]
    %v318 = vld [vmem:[%s1 + $0x960] sm:$0xff]
    %v319 = vld [vmem:[%s1 + $0x968] sm:$0xff]
    %v320 = vld [vmem:[%s1 + $0x970] sm:$0xff]
    %v321 = vld [vmem:[%s1 + $0x978] sm:$0xff]
    %v322 = vld [vmem:[%s1 + $0x980] sm:$0xff]
    %v323 = vld [vmem:[%s1 + $0x988] sm:$0xff]
    %v324 = vld [vmem:[%s1 + $0x990] sm:$0xff]
    %v325 = vld [vmem:[%s1 + $0x998] sm:$0xff]
    %v326 = vld [vmem:[%s1 + $0x9a0] sm:$0xff]
    %v327 = vld [vmem:[%s1 + $0x9a8] sm:$0xff]
    %v328 = vld [vmem:[%s1 + $0x9b0] sm:$0xff]
    %v329 = vld [vmem:[%s1 + $0x9b8] sm:$0xff]
    %v330 = vld [vmem:[%s1 + $0x9c0] sm:$0xff]
    %v331 = vld [vmem:[%s1 + $0x9c8] sm:$0xff]
    %v332 = vld [vmem:[%s1 + $0x9d0] sm:$0xff]
    %v333 = vld [vmem:[%s1 + $0x9d8] sm:$0xff]
    %v334 = vld [vmem:[%s1 + $0x9e0] sm:$0xff]
    %v335 = vld [vmem:[%s1 + $0x9e8] sm:$0xff]
    %v336 = vld [vmem:[%s1 + $0x9f0] sm:$0xff]
    %v337 = vld [vmem:[%s1 + $0x9f8] sm:$0xff]
    %v338 = vld [vmem:[%s1 + $0xa00] sm:$0xff]
    %v339 = vld [vmem:[%s1 + $0xa08] sm:$0xff]
    %v340 = vld [vmem:[%s1 + $0xa10] sm:$0xff]
    %v341 = vld [vmem:[%s1 + $0xa18] sm:$0xff]
    %v342 = vld [vmem:[%s1 + $0xa20] sm:$0xff]
    %v343 = vld [vmem:[%s1 + $0xa28] sm:$0xff]
    %v344 = vld [vmem:[%s1 + $0xa30] sm:$0xff]
    %v345 = vld [vmem:[%s1 + $0xa38] sm:$0xff]
    %v346 = vld [vmem:[%s1 + $0xa40] sm:$0xff]
    %v347 = vld [vmem:[%s1 + $0xa48] sm:$0xff]
    %v348 = vld [vmem:[%s1 + $0xa50] sm:$0xff]
    %v349 = vld [vmem:[%s1 + $0xa58] sm:$0xff]
    %v350 = vld [vmem:[%s1 + $0xa60] sm:$0xff]
    %v351 = vld [vmem:[%s1 + $0xa68] sm:$0xff]
    %v352 = vld [vmem:[%s1 + $0xa70] sm:$0xff]
    %v353 = vld [vmem:[%s1 + $0xa78] sm:$0xff]
    %v354 = vld [vmem:[%s1 + $0xa80] sm:$0xff]
    %v355 = vld [vmem:[%s1 + $0xa88] sm:$0xff]
    %v356 = vld [vmem:[%s1 + $0xa90] sm:$0xff]
    %v357 = vld [vmem:[%s1 + $0xa98] sm:$0xff]
    %v358 = vld [vmem:[%s1 + $0xaa0] sm:$0xff]
    %v359 = vld [vmem:[%s1 + $0xaa8] sm:$0xff]
    %v360 = vld [vmem:[%s1 + $0xab0] sm:$0xff]
    %v361 = vld [vmem:[%s1 + $0xab8] sm:$0xff]
    %v362 = vld [vmem:[%s1 + $0xac0] sm:$0xff]
    %v363 = vld [vmem:[%s1 + $0xac8] sm:$0xff]
    %v364 = vld [vmem:[%s1 + $0xad0] sm:$0xff]
    %v365 = vld [vmem:[%s1 + $0xad8] sm:$0xff]
    %v366 = vld [vmem:[%s1 + $0xae0] sm:$0xff]
    %v367 = vld [vmem:[%s1 + $0xae8] sm:$0xff]
    %v368 = vld [vmem:[%s1 + $0xaf0] sm:$0xff]
    %v369 = vld [vmem:[%s1 + $0xaf8] sm:$0xff]
    %v370 = vld [vmem:[%s1 + $0xb00] sm:$0xff]
    %v371 = vld [vmem:[%s1 + $0xb08] sm:$0xff]
    %v372 = vld [vmem:[%s1 + $0xb10] sm:$0xff]
    %v373 = vld [vmem:[%s1 + $0xb18] sm:$0xff]
    %v374 = vld [vmem:[%s1 + $0xb20] sm:$0xff]
    %v375 = vld [vmem:[%s1 + $0xb28] sm:$0xff]
    %v376 = vld [vmem:[%s1 + $0xb30] sm:$0xff]
    %v377 = vld [vmem:[%s1 + $0xb38] sm:$0xff]
    %v378 = vld [vmem:[%s1 + $0xb40] sm:$0xff]
    %v379 = vld [vmem:[%s1 + $0xb48] sm:$0xff]
    %v380 = vld [vmem:[%s1 + $0xb50] sm:$0xff]
    %v381 = vld [vmem:[%s1 + $0xb58] sm:$0xff]
    %v382 = vld [vmem:[%s1 + $0xb60] sm:$0xff]
    %v383 = vld [vmem:[%s1 + $0xb68] sm:$0xff]
    %v384 = vld [vmem:[%s1 + $0xb70] sm:$0xff]
    %v385 = vld [vmem:[%s1 + $0xb78] sm:$0xff]
    %v386 = vld [vmem:[%s1 + $0xb80] sm:$0xff]
    %v387 = vld [vmem:[%s1 + $0xb88] sm:$0xff]
    %v388 = vld [vmem:[%s1 + $0xb90] sm:$0xff]
    %v389 = vld [vmem:[%s1 + $0xb98] sm:$0xff]
    %v390 = vld [vmem:[%s1 + $0xba0] sm:$0xff]
    %v391 = vld [vmem:[%s1 + $0xba8] sm:$0xff]
    %v392 = vld [vmem:[%s1 + $0xbb0] sm:$0xff]
    %v393 = vld [vmem:[%s1 + $0xbb8] sm:$0xff]
    %v394 = vld [vmem:[%s1 + $0xbc0] sm:$0xff]
    %v395 = vld [vmem:[%s1 + $0xbc8] sm:$0xff]
    %v396 = vld [vmem:[%s1 + $0xbd0] sm:$0xff]
    %v397 = vld [vmem:[%s1 + $0xbd8] sm:$0xff]
    %v398 = vld [vmem:[%s1 + $0xbe0] sm:$0xff]
    %v399 = vld [vmem:[%s1 + $0xbe8] sm:$0xff]
    %v400 = vld [vmem:[%s1 + $0xbf0] sm:$0xff]
    %v401 = vld [vmem:[%s1 + $0xbf8] sm:$0xff]
    %v408 = vcombine.high %v12, %v12
    %v410 = vunpack.c.l.s4 1983009808
    %v411 = vunpack.c.0.s8 %v410
    %v412 = vlaneseq
    %v413 = vshrl.u32 %v412, 7
    %v414 = vsub.s32 %v411, %v413
    %v415 = vrot.slane %v12, %v414
    %v417 = vunpack.c.l.s4 1983009808
    %v418 = vunpack.c.0.s8 %v417
    %v419 = vlaneseq
    %v420 = vshrl.u32 %v419, 7
    %v421 = vsub.s32 %v418, %v420
    %v422 = vrot.slane %v408, %v421
    %v423 = vcombine.high %v415, %v415
    %v424 = vcombine.high %v422, %v422
    %v425 = vcombine.high %v13, %v13
    %v427 = vunpack.c.l.s4 1983009808
    %v428 = vunpack.c.0.s8 %v427
    %v429 = vlaneseq
    %v430 = vshrl.u32 %v429, 7
    %v431 = vsub.s32 %v428, %v430
    %v432 = vrot.slane %v13, %v431
    %v434 = vunpack.c.l.s4 1983009808
    %v435 = vunpack.c.0.s8 %v434
    %v436 = vlaneseq
    %v437 = vshrl.u32 %v436, 7
    %v438 = vsub.s32 %v435, %v437
    %v439 = vrot.slane %v425, %v438
    %v440 = vcombine.high %v432, %v432
    %v441 = vcombine.high %v439, %v439
    %v442 = vcombine.high %v14, %v14
    %v444 = vunpack.c.l.s4 1983009808
    %v445 = vunpack.c.0.s8 %v444
    %v446 = vlaneseq
    %v447 = vshrl.u32 %v446, 7
    %v448 = vsub.s32 %v445, %v447
    %v449 = vrot.slane %v14, %v448
    %v451 = vunpack.c.l.s4 1983009808
    %v452 = vunpack.c.0.s8 %v451
    %v453 = vlaneseq
    %v454 = vshrl.u32 %v453, 7
    %v455 = vsub.s32 %v452, %v454
    %v456 = vrot.slane %v442, %v455
    %v457 = vcombine.high %v449, %v449
    %v458 = vcombine.high %v456, %v456
    %v459 = vcombine.high %v15, %v15
    %v461 = vunpack.c.l.s4 1983009808
    %v462 = vunpack.c.0.s8 %v461
    %v463 = vlaneseq
    %v464 = vshrl.u32 %v463, 7
    %v465 = vsub.s32 %v462, %v464
    %v466 = vrot.slane %v15, %v465
    %v468 = vunpack.c.l.s4 1983009808
    %v469 = vunpack.c.0.s8 %v468
    %v470 = vlaneseq
    %v471 = vshrl.u32 %v470, 7
    %v472 = vsub.s32 %v469, %v471
    %v473 = vrot.slane %v459, %v472
    %v474 = vcombine.high %v466, %v466
    %v475 = vcombine.high %v473, %v473
    %v476 = vcombine.high %v16, %v16
    %v478 = vunpack.c.l.s4 1983009808
    %v479 = vunpack.c.0.s8 %v478
    %v480 = vlaneseq
    %v481 = vshrl.u32 %v480, 7
    %v482 = vsub.s32 %v479, %v481
    %v483 = vrot.slane %v16, %v482
    %v485 = vunpack.c.l.s4 1983009808
    %v486 = vunpack.c.0.s8 %v485
    %v487 = vlaneseq
    %v488 = vshrl.u32 %v487, 7
    %v489 = vsub.s32 %v486, %v488
    %v490 = vrot.slane %v476, %v489
    %v491 = vcombine.high %v483, %v483
    %v492 = vcombine.high %v490, %v490
    %v493 = vcombine.high %v17, %v17
    %v495 = vunpack.c.l.s4 1983009808
    %v496 = vunpack.c.0.s8 %v495
    %v497 = vlaneseq
    %v498 = vshrl.u32 %v497, 7
    %v499 = vsub.s32 %v496, %v498
    %v500 = vrot.slane %v17, %v499
    %v502 = vunpack.c.l.s4 1983009808
    %v503 = vunpack.c.0.s8 %v502
    %v504 = vlaneseq
    %v505 = vshrl.u32 %v504, 7
    %v506 = vsub.s32 %v503, %v505
    %v507 = vrot.slane %v493, %v506
    %v508 = vcombine.high %v500, %v500
    %v509 = vcombine.high %v507, %v507
    %534 = vmatprep.subr.mxu0 0.0
    %535 = vmatpush1.msra.mxu0 %v18
    %536 = vmatprep.subr.mxu0 0.0
    %537 = vmatpush1.msra.mxu0 %v19
    %538 = vmatprep.subr.mxu0 0.0
    %539 = vmatpush1.msra.mxu0 %v20
    %540 = vmatprep.subr.mxu0 0.0
    %541 = vmatpush1.msra.mxu0 %v21
    %542 = vmatprep.subr.mxu0 0.0
    %543 = vmatpush1.msra.mxu0 %v22
    %544 = vmatprep.subr.mxu0 0.0
    %545 = vmatpush1.msra.mxu0 %v23
    %546 = vmatprep.subr.mxu0 0.0
    %547 = vmatpush1.msra.mxu0 %v24
    %548 = vmatprep.subr.mxu0 0.0
    %549 = vmatpush1.msra.mxu0 %v25
    %550 = vmatprep.subr.mxu0 0.0
    %551 = vmatpush1.msra.mxu0 %v26
    %552 = vmatprep.subr.mxu0 0.0
    %553 = vmatpush1.msra.mxu0 %v27
    %554 = vmatprep.subr.mxu0 0.0
    %555 = vmatpush1.msra.mxu0 %v28
    %556 = vmatprep.subr.mxu0 0.0
    %557 = vmatpush1.msra.mxu0 %v29
    %558 = vmatprep.subr.mxu0 0.0
    %559 = vmatpush1.msra.mxu0 %v30
    %560 = vmatprep.subr.mxu0 0.0
    %561 = vmatpush1.msra.mxu0 %v31
    %562 = vmatprep.subr.mxu0 0.0
    %563 = vmatpush1.msra.mxu0 %v32
    %564 = vmatprep.subr.mxu0 0.0
    %565 = vmatpush1.msra.mxu0 %v33
    %566 = vmatprep.subr.mxu0 0.0
    %567 = vmatpush1.msra.mxu0 %v34
    %568 = vmatprep.subr.mxu0 0.0
    %569 = vmatpush1.msra.mxu0 %v35
    %570 = vmatprep.subr.mxu0 0.0
    %571 = vmatpush1.msra.mxu0 %v36
    %572 = vmatprep.subr.mxu0 0.0
    %573 = vmatpush1.msra.mxu0 %v37
    %574 = vmatprep.subr.mxu0 0.0
    %575 = vmatpush1.msra.mxu0 %v38
    %576 = vmatprep.subr.mxu0 0.0
    %577 = vmatpush1.msra.mxu0 %v39
    %578 = vmatprep.subr.mxu0 0.0
    %579 = vmatpush1.msra.mxu0 %v40
    %580 = vmatprep.subr.mxu0 0.0
    %581 = vmatpush1.msra.mxu0 %v41
    %582 = vmatprep.subr.mxu0 0.0
    %583 = vmatpush1.msra.mxu0 %v42
    %584 = vmatprep.subr.mxu0 0.0
    %585 = vmatpush1.msra.mxu0 %v43
    %586 = vmatprep.subr.mxu0 0.0
    %587 = vmatpush1.msra.mxu0 %v44
    %588 = vmatprep.subr.mxu0 0.0
    %589 = vmatpush1.msra.mxu0 %v45
    %590 = vmatprep.subr.mxu0 0.0
    %591 = vmatpush1.msra.mxu0 %v46
    %592 = vmatprep.subr.mxu0 0.0
    %593 = vmatpush1.msra.mxu0 %v47
    %594 = vmatprep.subr.mxu0 0.0
    %595 = vmatpush1.msra.mxu0 %v48
    %596 = vmatprep.subr.mxu0 0.0
    %597 = vmatpush1.msra.mxu0 %v49
    %598 = vmatprep.mubr.f32.mxu0 %v423
    %599 = vmatmul.mubr.f32.gmra.mrb[0].mxu0 %v415
    %v600 = vpop.f32.mrb[0].mxu0
    %v601 = vadd.f32 0.0, %v600
    %v602 = vpop.f32.mrb[0].mxu0
    %603 = vdwg.mxu0
    %604 = vmatprep.subr.mxu0 0.0
    %605 = vmatpush1.msra.mxu0 %v50
    %606 = vmatprep.subr.mxu0 0.0
    %607 = vmatpush1.msra.mxu0 %v51
    %608 = vmatprep.subr.mxu0 0.0
    %609 = vmatpush1.msra.mxu0 %v52
    %610 = vmatprep.subr.mxu0 0.0
    %611 = vmatpush1.msra.mxu0 %v53
    %612 = vmatprep.subr.mxu0 0.0
    %613 = vmatpush1.msra.mxu0 %v54
    %614 = vmatprep.subr.mxu0 0.0
    %615 = vmatpush1.msra.mxu0 %v55
    %616 = vmatprep.subr.mxu0 0.0
    %617 = vmatpush1.msra.mxu0 %v56
    %618 = vmatprep.subr.mxu0 0.0
    %619 = vmatpush1.msra.mxu0 %v57
    %620 = vmatprep.subr.mxu0 0.0
    %621 = vmatpush1.msra.mxu0 %v58
    %622 = vmatprep.subr.mxu0 0.0
    %623 = vmatpush1.msra.mxu0 %v59
    %624 = vmatprep.subr.mxu0 0.0
    %625 = vmatpush1.msra.mxu0 %v60
    %626 = vmatprep.subr.mxu0 0.0
    %627 = vmatpush1.msra.mxu0 %v61
    %628 = vmatprep.subr.mxu0 0.0
    %629 = vmatpush1.msra.mxu0 %v62
    %630 = vmatprep.subr.mxu0 0.0
    %631 = vmatpush1.msra.mxu0 %v63
    %632 = vmatprep.subr.mxu0 0.0
    %633 = vmatpush1.msra.mxu0 %v64
    %634 = vmatprep.subr.mxu0 0.0
    %635 = vmatpush1.msra.mxu0 %v65
    %636 = vmatprep.subr.mxu0 0.0
    %637 = vmatpush1.msra.mxu0 %v66
    %638 = vmatprep.subr.mxu0 0.0
    %639 = vmatpush1.msra.mxu0 %v67
    %640 = vmatprep.subr.mxu0 0.0
    %641 = vmatpush1.msra.mxu0 %v68
    %642 = vmatprep.subr.mxu0 0.0
    %643 = vmatpush1.msra.mxu0 %v69
    %644 = vmatprep.subr.mxu0 0.0
    %645 = vmatpush1.msra.mxu0 %v70
    %646 = vmatprep.subr.mxu0 0.0
    %647 = vmatpush1.msra.mxu0 %v71
    %648 = vmatprep.subr.mxu0 0.0
    %649 = vmatpush1.msra.mxu0 %v72
    %650 = vmatprep.subr.mxu0 0.0
    %651 = vmatpush1.msra.mxu0 %v73
    %652 = vmatprep.subr.mxu0 0.0
    %653 = vmatpush1.msra.mxu0 %v74
    %654 = vmatprep.subr.mxu0 0.0
    %655 = vmatpush1.msra.mxu0 %v75
    %656 = vmatprep.subr.mxu0 0.0
    %657 = vmatpush1.msra.mxu0 %v76
    %658 = vmatprep.subr.mxu0 0.0
    %659 = vmatpush1.msra.mxu0 %v77
    %660 = vmatprep.subr.mxu0 0.0
    %661 = vmatpush1.msra.mxu0 %v78
    %662 = vmatprep.subr.mxu0 0.0
    %663 = vmatpush1.msra.mxu0 %v79
    %664 = vmatprep.subr.mxu0 0.0
    %665 = vmatpush1.msra.mxu0 %v80
    %666 = vmatprep.subr.mxu0 0.0
    %667 = vmatpush1.msra.mxu0 %v81
    %668 = vmatprep.mubr.f32.mxu0 %v424
    %669 = vmatmul.mubr.f32.gmra.mrb[0].mxu0 %v422
    %v670 = vpop.f32.mrb[0].mxu0
    %v671 = vadd.f32 %v601, %v670
    %v672 = vpop.f32.mrb[0].mxu0
    %673 = vdwg.mxu0
    %674 = vmatprep.subr.mxu0 0.0
    %675 = vmatpush1.msra.mxu0 %v82
    %676 = vmatprep.subr.mxu0 0.0
    %677 = vmatpush1.msra.mxu0 %v83
    %678 = vmatprep.subr.mxu0 0.0
    %679 = vmatpush1.msra.mxu0 %v84
    %680 = vmatprep.subr.mxu0 0.0
    %681 = vmatpush1.msra.mxu0 %v85
    %682 = vmatprep.subr.mxu0 0.0
    %683 = vmatpush1.msra.mxu0 %v86
    %684 = vmatprep.subr.mxu0 0.0
    %685 = vmatpush1.msra.mxu0 %v87
    %686 = vmatprep.subr.mxu0 0.0
    %687 = vmatpush1.msra.mxu0 %v88
    %688 = vmatprep.subr.mxu0 0.0
    %689 = vmatpush1.msra.mxu0 %v89
    %690 = vmatprep.subr.mxu0 0.0
    %691 = vmatpush1.msra.mxu0 %v90
    %692 = vmatprep.subr.mxu0 0.0
    %693 = vmatpush1.msra.mxu0 %v91
    %694 = vmatprep.subr.mxu0 0.0
    %695 = vmatpush1.msra.mxu0 %v92
    %696 = vmatprep.subr.mxu0 0.0
    %697 = vmatpush1.msra.mxu0 %v93
    %698 = vmatprep.subr.mxu0 0.0
    %699 = vmatpush1.msra.mxu0 %v94
    %700 = vmatprep.subr.mxu0 0.0
    %701 = vmatpush1.msra.mxu0 %v95
    %702 = vmatprep.subr.mxu0 0.0
    %703 = vmatpush1.msra.mxu0 %v96
    %704 = vmatprep.subr.mxu0 0.0
    %705 = vmatpush1.msra.mxu0 %v97
    %706 = vmatprep.subr.mxu0 0.0
    %707 = vmatpush1.msra.mxu0 %v98
    %708 = vmatprep.subr.mxu0 0.0
    %709 = vmatpush1.msra.mxu0 %v99
    %710 = vmatprep.subr.mxu0 0.0
    %711 = vmatpush1.msra.mxu0 %v100
    %712 = vmatprep.subr.mxu0 0.0
    %713 = vmatpush1.msra.mxu0 %v101
    %714 = vmatprep.subr.mxu0 0.0
    %715 = vmatpush1.msra.mxu0 %v102
    %716 = vmatprep.subr.mxu0 0.0
    %717 = vmatpush1.msra.mxu0 %v103
    %718 = vmatprep.subr.mxu0 0.0
    %719 = vmatpush1.msra.mxu0 %v104
    %720 = vmatprep.subr.mxu0 0.0
    %721 = vmatpush1.msra.mxu0 %v105
    %722 = vmatprep.subr.mxu0 0.0
    %723 = vmatpush1.msra.mxu0 %v106
    %724 = vmatprep.subr.mxu0 0.0
    %725 = vmatpush1.msra.mxu0 %v107
    %726 = vmatprep.subr.mxu0 0.0
    %727 = vmatpush1.msra.mxu0 %v108
    %728 = vmatprep.subr.mxu0 0.0
    %729 = vmatpush1.msra.mxu0 %v109
    %730 = vmatprep.subr.mxu0 0.0
    %731 = vmatpush1.msra.mxu0 %v110
    %732 = vmatprep.subr.mxu0 0.0
    %733 = vmatpush1.msra.mxu0 %v111
    %734 = vmatprep.subr.mxu0 0.0
    %735 = vmatpush1.msra.mxu0 %v112
    %736 = vmatprep.subr.mxu0 0.0
    %737 = vmatpush1.msra.mxu0 %v113
    %738 = vmatprep.mubr.f32.mxu0 %v440
    %739 = vmatmul.mubr.f32.gmra.mrb[0].mxu0 %v432
    %v740 = vpop.f32.mrb[0].mxu0
    %v741 = vadd.f32 %v671, %v740
    %v742 = vpop.f32.mrb[0].mxu0
    %743 = vdwg.mxu0
    %744 = vmatprep.subr.mxu0 0.0
    %745 = vmatpush1.msra.mxu0 %v114
    %746 = vmatprep.subr.mxu0 0.0
    %747 = vmatpush1.msra.mxu0 %v115
    %748 = vmatprep.subr.mxu0 0.0
    %749 = vmatpush1.msra.mxu0 %v116
    %750 = vmatprep.subr.mxu0 0.0
    %751 = vmatpush1.msra.mxu0 %v117
    %752 = vmatprep.subr.mxu0 0.0
    %753 = vmatpush1.msra.mxu0 %v118
    %754 = vmatprep.subr.mxu0 0.0
    %755 = vmatpush1.msra.mxu0 %v119
    %756 = vmatprep.subr.mxu0 0.0
    %757 = vmatpush1.msra.mxu0 %v120
    %758 = vmatprep.subr.mxu0 0.0
    %759 = vmatpush1.msra.mxu0 %v121
    %760 = vmatprep.subr.mxu0 0.0
    %761 = vmatpush1.msra.mxu0 %v122
    %762 = vmatprep.subr.mxu0 0.0
    %763 = vmatpush1.msra.mxu0 %v123
    %764 = vmatprep.subr.mxu0 0.0
    %765 = vmatpush1.msra.mxu0 %v124
    %766 = vmatprep.subr.mxu0 0.0
    %767 = vmatpush1.msra.mxu0 %v125
    %768 = vmatprep.subr.mxu0 0.0
    %769 = vmatpush1.msra.mxu0 %v126
    %770 = vmatprep.subr.mxu0 0.0
    %771 = vmatpush1.msra.mxu0 %v127
    %772 = vmatprep.subr.mxu0 0.0
    %773 = vmatpush1.msra.mxu0 %v128
    %774 = vmatprep.subr.mxu0 0.0
    %775 = vmatpush1.msra.mxu0 %v129
    %776 = vmatprep.subr.mxu0 0.0
    %777 = vmatpush1.msra.mxu0 %v130
    %778 = vmatprep.subr.mxu0 0.0
    %779 = vmatpush1.msra.mxu0 %v131
    %780 = vmatprep.subr.mxu0 0.0
    %781 = vmatpush1.msra.mxu0 %v132
    %782 = vmatprep.subr.mxu0 0.0
    %783 = vmatpush1.msra.mxu0 %v133
    %784 = vmatprep.subr.mxu0 0.0
    %785 = vmatpush1.msra.mxu0 %v134
    %786 = vmatprep.subr.mxu0 0.0
    %787 = vmatpush1.msra.mxu0 %v135
    %788 = vmatprep.subr.mxu0 0.0
    %789 = vmatpush1.msra.mxu0 %v136
    %790 = vmatprep.subr.mxu0 0.0
    %791 = vmatpush1.msra.mxu0 %v137
    %792 = vmatprep.subr.mxu0 0.0
    %793 = vmatpush1.msra.mxu0 %v138
    %794 = vmatprep.subr.mxu0 0.0
    %795 = vmatpush1.msra.mxu0 %v139
    %796 = vmatprep.subr.mxu0 0.0
    %797 = vmatpush1.msra.mxu0 %v140
    %798 = vmatprep.subr.mxu0 0.0
    %799 = vmatpush1.msra.mxu0 %v141
    %800 = vmatprep.subr.mxu0 0.0
    %801 = vmatpush1.msra.mxu0 %v142
    %802 = vmatprep.subr.mxu0 0.0
    %803 = vmatpush1.msra.mxu0 %v143
    %804 = vmatprep.subr.mxu0 0.0
    %805 = vmatpush1.msra.mxu0 %v144
    %806 = vmatprep.subr.mxu0 0.0
    %807 = vmatpush1.msra.mxu0 %v145
    %808 = vmatprep.mubr.f32.mxu0 %v441
    %809 = vmatmul.mubr.f32.gmra.mrb[0].mxu0 %v439
    %v810 = vpop.f32.mrb[0].mxu0
    %v811 = vadd.f32 %v741, %v810
    %v812 = vpop.f32.mrb[0].mxu0
    %813 = vdwg.mxu0
    %814 = vmatprep.subr.mxu0 0.0
    %815 = vmatpush1.msra.mxu0 %v146
    %816 = vmatprep.subr.mxu0 0.0
    %817 = vmatpush1.msra.mxu0 %v147
    %818 = vmatprep.subr.mxu0 0.0
    %819 = vmatpush1.msra.mxu0 %v148
    %820 = vmatprep.subr.mxu0 0.0
    %821 = vmatpush1.msra.mxu0 %v149
    %822 = vmatprep.subr.mxu0 0.0
    %823 = vmatpush1.msra.mxu0 %v150
    %824 = vmatprep.subr.mxu0 0.0
    %825 = vmatpush1.msra.mxu0 %v151
    %826 = vmatprep.subr.mxu0 0.0
    %827 = vmatpush1.msra.mxu0 %v152
    %828 = vmatprep.subr.mxu0 0.0
    %829 = vmatpush1.msra.mxu0 %v153
    %830 = vmatprep.subr.mxu0 0.0
    %831 = vmatpush1.msra.mxu0 %v154
    %832 = vmatprep.subr.mxu0 0.0
    %833 = vmatpush1.msra.mxu0 %v155
    %834 = vmatprep.subr.mxu0 0.0
    %835 = vmatpush1.msra.mxu0 %v156
    %836 = vmatprep.subr.mxu0 0.0
    %837 = vmatpush1.msra.mxu0 %v157
    %838 = vmatprep.subr.mxu0 0.0
    %839 = vmatpush1.msra.mxu0 %v158
    %840 = vmatprep.subr.mxu0 0.0
    %841 = vmatpush1.msra.mxu0 %v159
    %842 = vmatprep.subr.mxu0 0.0
    %843 = vmatpush1.msra.mxu0 %v160
    %844 = vmatprep.subr.mxu0 0.0
    %845 = vmatpush1.msra.mxu0 %v161
    %846 = vmatprep.subr.mxu0 0.0
    %847 = vmatpush1.msra.mxu0 %v162
    %848 = vmatprep.subr.mxu0 0.0
    %849 = vmatpush1.msra.mxu0 %v163
    %850 = vmatprep.subr.mxu0 0.0
    %851 = vmatpush1.msra.mxu0 %v164
    %852 = vmatprep.subr.mxu0 0.0
    %853 = vmatpush1.msra.mxu0 %v165
    %854 = vmatprep.subr.mxu0 0.0
    %855 = vmatpush1.msra.mxu0 %v166
    %856 = vmatprep.subr.mxu0 0.0
    %857 = vmatpush1.msra.mxu0 %v167
    %858 = vmatprep.subr.mxu0 0.0
    %859 = vmatpush1.msra.mxu0 %v168
    %860 = vmatprep.subr.mxu0 0.0
    %861 = vmatpush1.msra.mxu0 %v169
    %862 = vmatprep.subr.mxu0 0.0
    %863 = vmatpush1.msra.mxu0 %v170
    %864 = vmatprep.subr.mxu0 0.0
    %865 = vmatpush1.msra.mxu0 %v171
    %866 = vmatprep.subr.mxu0 0.0
    %867 = vmatpush1.msra.mxu0 %v172
    %868 = vmatprep.subr.mxu0 0.0
    %869 = vmatpush1.msra.mxu0 %v173
    %870 = vmatprep.subr.mxu0 0.0
    %871 = vmatpush1.msra.mxu0 %v174
    %872 = vmatprep.subr.mxu0 0.0
    %873 = vmatpush1.msra.mxu0 %v175
    %874 = vmatprep.subr.mxu0 0.0
    %875 = vmatpush1.msra.mxu0 %v176
    %876 = vmatprep.subr.mxu0 0.0
    %877 = vmatpush1.msra.mxu0 %v177
    %878 = vmatprep.mubr.f32.mxu0 %v457
    %879 = vmatmul.mubr.f32.gmra.mrb[0].mxu0 %v449
    %v880 = vpop.f32.mrb[0].mxu0
    %v881 = vadd.f32 %v811, %v880
    %v882 = vpop.f32.mrb[0].mxu0
    %883 = vdwg.mxu0
    %884 = vmatprep.subr.mxu0 0.0
    %885 = vmatpush1.msra.mxu0 %v178
    %886 = vmatprep.subr.mxu0 0.0
    %887 = vmatpush1.msra.mxu0 %v179
    %888 = vmatprep.subr.mxu0 0.0
    %889 = vmatpush1.msra.mxu0 %v180
    %890 = vmatprep.subr.mxu0 0.0
    %891 = vmatpush1.msra.mxu0 %v181
    %892 = vmatprep.subr.mxu0 0.0
    %893 = vmatpush1.msra.mxu0 %v182
    %894 = vmatprep.subr.mxu0 0.0
    %895 = vmatpush1.msra.mxu0 %v183
    %896 = vmatprep.subr.mxu0 0.0
    %897 = vmatpush1.msra.mxu0 %v184
    %898 = vmatprep.subr.mxu0 0.0
    %899 = vmatpush1.msra.mxu0 %v185
    %900 = vmatprep.subr.mxu0 0.0
    %901 = vmatpush1.msra.mxu0 %v186
    %902 = vmatprep.subr.mxu0 0.0
    %903 = vmatpush1.msra.mxu0 %v187
    %904 = vmatprep.subr.mxu0 0.0
    %905 = vmatpush1.msra.mxu0 %v188
    %906 = vmatprep.subr.mxu0 0.0
    %907 = vmatpush1.msra.mxu0 %v189
    %908 = vmatprep.subr.mxu0 0.0
    %909 = vmatpush1.msra.mxu0 %v190
    %910 = vmatprep.subr.mxu0 0.0
    %911 = vmatpush1.msra.mxu0 %v191
    %912 = vmatprep.subr.mxu0 0.0
    %913 = vmatpush1.msra.mxu0 %v192
    %914 = vmatprep.subr.mxu0 0.0
    %915 = vmatpush1.msra.mxu0 %v193
    %916 = vmatprep.subr.mxu0 0.0
    %917 = vmatpush1.msra.mxu0 %v194
    %918 = vmatprep.subr.mxu0 0.0
    %919 = vmatpush1.msra.mxu0 %v195
    %920 = vmatprep.subr.mxu0 0.0
    %921 = vmatpush1.msra.mxu0 %v196
    %922 = vmatprep.subr.mxu0 0.0
    %923 = vmatpush1.msra.mxu0 %v197
    %924 = vmatprep.subr.mxu0 0.0
    %925 = vmatpush1.msra.mxu0 %v198
    %926 = vmatprep.subr.mxu0 0.0
    %927 = vmatpush1.msra.mxu0 %v199
    %928 = vmatprep.subr.mxu0 0.0
    %929 = vmatpush1.msra.mxu0 %v200
    %930 = vmatprep.subr.mxu0 0.0
    %931 = vmatpush1.msra.mxu0 %v201
    %932 = vmatprep.subr.mxu0 0.0
    %933 = vmatpush1.msra.mxu0 %v202
    %934 = vmatprep.subr.mxu0 0.0
    %935 = vmatpush1.msra.mxu0 %v203
    %936 = vmatprep.subr.mxu0 0.0
    %937 = vmatpush1.msra.mxu0 %v204
    %938 = vmatprep.subr.mxu0 0.0
    %939 = vmatpush1.msra.mxu0 %v205
    %940 = vmatprep.subr.mxu0 0.0
    %941 = vmatpush1.msra.mxu0 %v206
    %942 = vmatprep.subr.mxu0 0.0
    %943 = vmatpush1.msra.mxu0 %v207
    %944 = vmatprep.subr.mxu0 0.0
    %945 = vmatpush1.msra.mxu0 %v208
    %946 = vmatprep.subr.mxu0 0.0
    %947 = vmatpush1.msra.mxu0 %v209
    %948 = vmatprep.mubr.f32.mxu0 %v458
    %949 = vmatmul.mubr.f32.gmra.mrb[0].mxu0 %v456
    %v950 = vpop.f32.mrb[0].mxu0
    %v951 = vadd.f32 %v881, %v950
    %v952 = vpop.f32.mrb[0].mxu0
    %953 = vdwg.mxu0
    %954 = vmatprep.subr.mxu0 0.0
    %955 = vmatpush1.msra.mxu0 %v210
    %956 = vmatprep.subr.mxu0 0.0
    %957 = vmatpush1.msra.mxu0 %v211
    %958 = vmatprep.subr.mxu0 0.0
    %959 = vmatpush1.msra.mxu0 %v212
    %960 = vmatprep.subr.mxu0 0.0
    %961 = vmatpush1.msra.mxu0 %v213
    %962 = vmatprep.subr.mxu0 0.0
    %963 = vmatpush1.msra.mxu0 %v214
    %964 = vmatprep.subr.mxu0 0.0
    %965 = vmatpush1.msra.mxu0 %v215
    %966 = vmatprep.subr.mxu0 0.0
    %967 = vmatpush1.msra.mxu0 %v216
    %968 = vmatprep.subr.mxu0 0.0
    %969 = vmatpush1.msra.mxu0 %v217
    %970 = vmatprep.subr.mxu0 0.0
    %971 = vmatpush1.msra.mxu0 %v218
    %972 = vmatprep.subr.mxu0 0.0
    %973 = vmatpush1.msra.mxu0 %v219
    %974 = vmatprep.subr.mxu0 0.0
    %975 = vmatpush1.msra.mxu0 %v220
    %976 = vmatprep.subr.mxu0 0.0
    %977 = vmatpush1.msra.mxu0 %v221
    %978 = vmatprep.subr.mxu0 0.0
    %979 = vmatpush1.msra.mxu0 %v222
    %980 = vmatprep.subr.mxu0 0.0
    %981 = vmatpush1.msra.mxu0 %v223
    %982 = vmatprep.subr.mxu0 0.0
    %983 = vmatpush1.msra.mxu0 %v224
    %984 = vmatprep.subr.mxu0 0.0
    %985 = vmatpush1.msra.mxu0 %v225
    %986 = vmatprep.subr.mxu0 0.0
    %987 = vmatpush1.msra.mxu0 %v226
    %988 = vmatprep.subr.mxu0 0.0
    %989 = vmatpush1.msra.mxu0 %v227
    %990 = vmatprep.subr.mxu0 0.0
    %991 = vmatpush1.msra.mxu0 %v228
    %992 = vmatprep.subr.mxu0 0.0
    %993 = vmatpush1.msra.mxu0 %v229
    %994 = vmatprep.subr.mxu0 0.0
    %995 = vmatpush1.msra.mxu0 %v230
    %996 = vmatprep.subr.mxu0 0.0
    %997 = vmatpush1.msra.mxu0 %v231
    %998 = vmatprep.subr.mxu0 0.0
    %999 = vmatpush1.msra.mxu0 %v232
    %1000 = vmatprep.subr.mxu0 0.0
    %1001 = vmatpush1.msra.mxu0 %v233
    %1002 = vmatprep.subr.mxu0 0.0
    %1003 = vmatpush1.msra.mxu0 %v234
    %1004 = vmatprep.subr.mxu0 0.0
    %1005 = vmatpush1.msra.mxu0 %v235
    %1006 = vmatprep.subr.mxu0 0.0
    %1007 = vmatpush1.msra.mxu0 %v236
    %1008 = vmatprep.subr.mxu0 0.0
    %1009 = vmatpush1.msra.mxu0 %v237
    %1010 = vmatprep.subr.mxu0 0.0
    %1011 = vmatpush1.msra.mxu0 %v238
    %1012 = vmatprep.subr.mxu0 0.0
    %1013 = vmatpush1.msra.mxu0 %v239
    %1014 = vmatprep.subr.mxu0 0.0
    %1015 = vmatpush1.msra.mxu0 %v240
    %1016 = vmatprep.subr.mxu0 0.0
    %1017 = vmatpush1.msra.mxu0 %v241
    %1018 = vmatprep.mubr.f32.mxu0 %v474
    %1019 = vmatmul.mubr.f32.gmra.mrb[0].mxu0 %v466
    %v1020 = vpop.f32.mrb[0].mxu0
    %v1021 = vadd.f32 %v951, %v1020
    %v1022 = vpop.f32.mrb[0].mxu0
    %1023 = vdwg.mxu0
    %1024 = vmatprep.subr.mxu0 0.0
    %1025 = vmatpush1.msra.mxu0 %v242
    %1026 = vmatprep.subr.mxu0 0.0
    %1027 = vmatpush1.msra.mxu0 %v243
    %1028 = vmatprep.subr.mxu0 0.0
    %1029 = vmatpush1.msra.mxu0 %v244
    %1030 = vmatprep.subr.mxu0 0.0
    %1031 = vmatpush1.msra.mxu0 %v245
    %1032 = vmatprep.subr.mxu0 0.0
    %1033 = vmatpush1.msra.mxu0 %v246
    %1034 = vmatprep.subr.mxu0 0.0
    %1035 = vmatpush1.msra.mxu0 %v247
    %1036 = vmatprep.subr.mxu0 0.0
    %1037 = vmatpush1.msra.mxu0 %v248
    %1038 = vmatprep.subr.mxu0 0.0
    %1039 = vmatpush1.msra.mxu0 %v249
    %1040 = vmatprep.subr.mxu0 0.0
    %1041 = vmatpush1.msra.mxu0 %v250
    %1042 = vmatprep.subr.mxu0 0.0
    %1043 = vmatpush1.msra.mxu0 %v251
    %1044 = vmatprep.subr.mxu0 0.0
    %1045 = vmatpush1.msra.mxu0 %v252
    %1046 = vmatprep.subr.mxu0 0.0
    %1047 = vmatpush1.msra.mxu0 %v253
    %1048 = vmatprep.subr.mxu0 0.0
    %1049 = vmatpush1.msra.mxu0 %v254
    %1050 = vmatprep.subr.mxu0 0.0
    %1051 = vmatpush1.msra.mxu0 %v255
    %1052 = vmatprep.subr.mxu0 0.0
    %1053 = vmatpush1.msra.mxu0 %v256
    %1054 = vmatprep.subr.mxu0 0.0
    %1055 = vmatpush1.msra.mxu0 %v257
    %1056 = vmatprep.subr.mxu0 0.0
    %1057 = vmatpush1.msra.mxu0 %v258
    %1058 = vmatprep.subr.mxu0 0.0
    %1059 = vmatpush1.msra.mxu0 %v259
    %1060 = vmatprep.subr.mxu0 0.0
    %1061 = vmatpush1.msra.mxu0 %v260
    %1062 = vmatprep.subr.mxu0 0.0
    %1063 = vmatpush1.msra.mxu0 %v261
    %1064 = vmatprep.subr.mxu0 0.0
    %1065 = vmatpush1.msra.mxu0 %v262
    %1066 = vmatprep.subr.mxu0 0.0
    %1067 = vmatpush1.msra.mxu0 %v263
    %1068 = vmatprep.subr.mxu0 0.0
    %1069 = vmatpush1.msra.mxu0 %v264
    %1070 = vmatprep.subr.mxu0 0.0
    %1071 = vmatpush1.msra.mxu0 %v265
    %1072 = vmatprep.subr.mxu0 0.0
    %1073 = vmatpush1.msra.mxu0 %v266
    %1074 = vmatprep.subr.mxu0 0.0
    %1075 = vmatpush1.msra.mxu0 %v267
    %1076 = vmatprep.subr.mxu0 0.0
    %1077 = vmatpush1.msra.mxu0 %v268
    %1078 = vmatprep.subr.mxu0 0.0
    %1079 = vmatpush1.msra.mxu0 %v269
    %1080 = vmatprep.subr.mxu0 0.0
    %1081 = vmatpush1.msra.mxu0 %v270
    %1082 = vmatprep.subr.mxu0 0.0
    %1083 = vmatpush1.msra.mxu0 %v271
    %1084 = vmatprep.subr.mxu0 0.0
    %1085 = vmatpush1.msra.mxu0 %v272
    %1086 = vmatprep.subr.mxu0 0.0
    %1087 = vmatpush1.msra.mxu0 %v273
    %1088 = vmatprep.mubr.f32.mxu0 %v475
    %1089 = vmatmul.mubr.f32.gmra.mrb[0].mxu0 %v473
    %v1090 = vpop.f32.mrb[0].mxu0
    %v1091 = vadd.f32 %v1021, %v1090
    %v1092 = vpop.f32.mrb[0].mxu0
    %1093 = vdwg.mxu0
    %1094 = vmatprep.subr.mxu0 0.0
    %1095 = vmatpush1.msra.mxu0 %v274
    %1096 = vmatprep.subr.mxu0 0.0
    %1097 = vmatpush1.msra.mxu0 %v275
    %1098 = vmatprep.subr.mxu0 0.0
    %1099 = vmatpush1.msra.mxu0 %v276
    %1100 = vmatprep.subr.mxu0 0.0
    %1101 = vmatpush1.msra.mxu0 %v277
    %1102 = vmatprep.subr.mxu0 0.0
    %1103 = vmatpush1.msra.mxu0 %v278
    %1104 = vmatprep.subr.mxu0 0.0
    %1105 = vmatpush1.msra.mxu0 %v279
    %1106 = vmatprep.subr.mxu0 0.0
    %1107 = vmatpush1.msra.mxu0 %v280
    %1108 = vmatprep.subr.mxu0 0.0
    %1109 = vmatpush1.msra.mxu0 %v281
    %1110 = vmatprep.subr.mxu0 0.0
    %1111 = vmatpush1.msra.mxu0 %v282
    %1112 = vmatprep.subr.mxu0 0.0
    %1113 = vmatpush1.msra.mxu0 %v283
    %1114 = vmatprep.subr.mxu0 0.0
    %1115 = vmatpush1.msra.mxu0 %v284
    %1116 = vmatprep.subr.mxu0 0.0
    %1117 = vmatpush1.msra.mxu0 %v285
    %1118 = vmatprep.subr.mxu0 0.0
    %1119 = vmatpush1.msra.mxu0 %v286
    %1120 = vmatprep.subr.mxu0 0.0
    %1121 = vmatpush1.msra.mxu0 %v287
    %1122 = vmatprep.subr.mxu0 0.0
    %1123 = vmatpush1.msra.mxu0 %v288
    %1124 = vmatprep.subr.mxu0 0.0
    %1125 = vmatpush1.msra.mxu0 %v289
    %1126 = vmatprep.subr.mxu0 0.0
    %1127 = vmatpush1.msra.mxu0 %v290
    %1128 = vmatprep.subr.mxu0 0.0
    %1129 = vmatpush1.msra.mxu0 %v291
    %1130 = vmatprep.subr.mxu0 0.0
    %1131 = vmatpush1.msra.mxu0 %v292
    %1132 = vmatprep.subr.mxu0 0.0
    %1133 = vmatpush1.msra.mxu0 %v293
    %1134 = vmatprep.subr.mxu0 0.0
    %1135 = vmatpush1.msra.mxu0 %v294
    %1136 = vmatprep.subr.mxu0 0.0
    %1137 = vmatpush1.msra.mxu0 %v295
    %1138 = vmatprep.subr.mxu0 0.0
    %1139 = vmatpush1.msra.mxu0 %v296
    %1140 = vmatprep.subr.mxu0 0.0
    %1141 = vmatpush1.msra.mxu0 %v297
    %1142 = vmatprep.subr.mxu0 0.0
    %1143 = vmatpush1.msra.mxu0 %v298
    %1144 = vmatprep.subr.mxu0 0.0
    %1145 = vmatpush1.msra.mxu0 %v299
    %1146 = vmatprep.subr.mxu0 0.0
    %1147 = vmatpush1.msra.mxu0 %v300
    %1148 = vmatprep.subr.mxu0 0.0
    %1149 = vmatpush1.msra.mxu0 %v301
    %1150 = vmatprep.subr.mxu0 0.0
    %1151 = vmatpush1.msra.mxu0 %v302
    %1152 = vmatprep.subr.mxu0 0.0
    %1153 = vmatpush1.msra.mxu0 %v303
    %1154 = vmatprep.subr.mxu0 0.0
    %1155 = vmatpush1.msra.mxu0 %v304
    %1156 = vmatprep.subr.mxu0 0.0
    %1157 = vmatpush1.msra.mxu0 %v305
    %1158 = vmatprep.mubr.f32.mxu0 %v491
    %1159 = vmatmul.mubr.f32.gmra.mrb[0].mxu0 %v483
    %v1160 = vpop.f32.mrb[0].mxu0
    %v1161 = vadd.f32 %v1091, %v1160
    %v1162 = vpop.f32.mrb[0].mxu0
    %1163 = vdwg.mxu0
    %1164 = vmatprep.subr.mxu0 0.0
    %1165 = vmatpush1.msra.mxu0 %v306
    %1166 = vmatprep.subr.mxu0 0.0
    %1167 = vmatpush1.msra.mxu0 %v307
    %1168 = vmatprep.subr.mxu0 0.0
    %1169 = vmatpush1.msra.mxu0 %v308
    %1170 = vmatprep.subr.mxu0 0.0
    %1171 = vmatpush1.msra.mxu0 %v309
    %1172 = vmatprep.subr.mxu0 0.0
    %1173 = vmatpush1.msra.mxu0 %v310
    %1174 = vmatprep.subr.mxu0 0.0
    %1175 = vmatpush1.msra.mxu0 %v311
    %1176 = vmatprep.subr.mxu0 0.0
    %1177 = vmatpush1.msra.mxu0 %v312
    %1178 = vmatprep.subr.mxu0 0.0
    %1179 = vmatpush1.msra.mxu0 %v313
    %1180 = vmatprep.subr.mxu0 0.0
    %1181 = vmatpush1.msra.mxu0 %v314
    %1182 = vmatprep.subr.mxu0 0.0
    %1183 = vmatpush1.msra.mxu0 %v315
    %1184 = vmatprep.subr.mxu0 0.0
    %1185 = vmatpush1.msra.mxu0 %v316
    %1186 = vmatprep.subr.mxu0 0.0
    %1187 = vmatpush1.msra.mxu0 %v317
    %1188 = vmatprep.subr.mxu0 0.0
    %1189 = vmatpush1.msra.mxu0 %v318
    %1190 = vmatprep.subr.mxu0 0.0
    %1191 = vmatpush1.msra.mxu0 %v319
    %1192 = vmatprep.subr.mxu0 0.0
    %1193 = vmatpush1.msra.mxu0 %v320
    %1194 = vmatprep.subr.mxu0 0.0
    %1195 = vmatpush1.msra.mxu0 %v321
    %1196 = vmatprep.subr.mxu0 0.0
    %1197 = vmatpush1.msra.mxu0 %v322
    %1198 = vmatprep.subr.mxu0 0.0
    %1199 = vmatpush1.msra.mxu0 %v323
    %1200 = vmatprep.subr.mxu0 0.0
    %1201 = vmatpush1.msra.mxu0 %v324
    %1202 = vmatprep.subr.mxu0 0.0
    %1203 = vmatpush1.msra.mxu0 %v325
    %1204 = vmatprep.subr.mxu0 0.0
    %1205 = vmatpush1.msra.mxu0 %v326
    %1206 = vmatprep.subr.mxu0 0.0
    %1207 = vmatpush1.msra.mxu0 %v327
    %1208 = vmatprep.subr.mxu0 0.0
    %1209 = vmatpush1.msra.mxu0 %v328
    %1210 = vmatprep.subr.mxu0 0.0
    %1211 = vmatpush1.msra.mxu0 %v329
    %1212 = vmatprep.subr.mxu0 0.0
    %1213 = vmatpush1.msra.mxu0 %v330
    %1214 = vmatprep.subr.mxu0 0.0
    %1215 = vmatpush1.msra.mxu0 %v331
    %1216 = vmatprep.subr.mxu0 0.0
    %1217 = vmatpush1.msra.mxu0 %v332
    %1218 = vmatprep.subr.mxu0 0.0
    %1219 = vmatpush1.msra.mxu0 %v333
    %1220 = vmatprep.subr.mxu0 0.0
    %1221 = vmatpush1.msra.mxu0 %v334
    %1222 = vmatprep.subr.mxu0 0.0
    %1223 = vmatpush1.msra.mxu0 %v335
    %1224 = vmatprep.subr.mxu0 0.0
    %1225 = vmatpush1.msra.mxu0 %v336
    %1226 = vmatprep.subr.mxu0 0.0
    %1227 = vmatpush1.msra.mxu0 %v337
    %1228 = vmatprep.mubr.f32.mxu0 %v492
    %1229 = vmatmul.mubr.f32.gmra.mrb[0].mxu0 %v490
    %v1230 = vpop.f32.mrb[0].mxu0
    %v1231 = vadd.f32 %v1161, %v1230
    %v1232 = vpop.f32.mrb[0].mxu0
    %1233 = vdwg.mxu0
    %1234 = vmatprep.subr.mxu0 0.0
    %1235 = vmatpush1.msra.mxu0 %v338
    %1236 = vmatprep.subr.mxu0 0.0
    %1237 = vmatpush1.msra.mxu0 %v339
    %1238 = vmatprep.subr.mxu0 0.0
    %1239 = vmatpush1.msra.mxu0 %v340
    %1240 = vmatprep.subr.mxu0 0.0
    %1241 = vmatpush1.msra.mxu0 %v341
    %1242 = vmatprep.subr.mxu0 0.0
    %1243 = vmatpush1.msra.mxu0 %v342
    %1244 = vmatprep.subr.mxu0 0.0
    %1245 = vmatpush1.msra.mxu0 %v343
    %1246 = vmatprep.subr.mxu0 0.0
    %1247 = vmatpush1.msra.mxu0 %v344
    %1248 = vmatprep.subr.mxu0 0.0
    %1249 = vmatpush1.msra.mxu0 %v345
    %1250 = vmatprep.subr.mxu0 0.0
    %1251 = vmatpush1.msra.mxu0 %v346
    %1252 = vmatprep.subr.mxu0 0.0
    %1253 = vmatpush1.msra.mxu0 %v347
    %1254 = vmatprep.subr.mxu0 0.0
    %1255 = vmatpush1.msra.mxu0 %v348
    %1256 = vmatprep.subr.mxu0 0.0
    %1257 = vmatpush1.msra.mxu0 %v349
    %1258 = vmatprep.subr.mxu0 0.0
    %1259 = vmatpush1.msra.mxu0 %v350
    %1260 = vmatprep.subr.mxu0 0.0
    %1261 = vmatpush1.msra.mxu0 %v351
    %1262 = vmatprep.subr.mxu0 0.0
    %1263 = vmatpush1.msra.mxu0 %v352
    %1264 = vmatprep.subr.mxu0 0.0
    %1265 = vmatpush1.msra.mxu0 %v353
    %1266 = vmatprep.subr.mxu0 0.0
    %1267 = vmatpush1.msra.mxu0 %v354
    %1268 = vmatprep.subr.mxu0 0.0
    %1269 = vmatpush1.msra.mxu0 %v355
    %1270 = vmatprep.subr.mxu0 0.0
    %1271 = vmatpush1.msra.mxu0 %v356
    %1272 = vmatprep.subr.mxu0 0.0
    %1273 = vmatpush1.msra.mxu0 %v357
    %1274 = vmatprep.subr.mxu0 0.0
    %1275 = vmatpush1.msra.mxu0 %v358
    %1276 = vmatprep.subr.mxu0 0.0
    %1277 = vmatpush1.msra.mxu0 %v359
    %1278 = vmatprep.subr.mxu0 0.0
    %1279 = vmatpush1.msra.mxu0 %v360
    %1280 = vmatprep.subr.mxu0 0.0
    %1281 = vmatpush1.msra.mxu0 %v361
    %1282 = vmatprep.subr.mxu0 0.0
    %1283 = vmatpush1.msra.mxu0 %v362
    %1284 = vmatprep.subr.mxu0 0.0
    %1285 = vmatpush1.msra.mxu0 %v363
    %1286 = vmatprep.subr.mxu0 0.0
    %1287 = vmatpush1.msra.mxu0 %v364
    %1288 = vmatprep.subr.mxu0 0.0
    %1289 = vmatpush1.msra.mxu0 %v365
    %1290 = vmatprep.subr.mxu0 0.0
    %1291 = vmatpush1.msra.mxu0 %v366
    %1292 = vmatprep.subr.mxu0 0.0
    %1293 = vmatpush1.msra.mxu0 %v367
    %1294 = vmatprep.subr.mxu0 0.0
    %1295 = vmatpush1.msra.mxu0 %v368
    %1296 = vmatprep.subr.mxu0 0.0
    %1297 = vmatpush1.msra.mxu0 %v369
    %1298 = vmatprep.mubr.f32.mxu0 %v508
    %1299 = vmatmul.mubr.f32.gmra.mrb[0].mxu0 %v500
    %v1300 = vpop.f32.mrb[0].mxu0
    %v1301 = vadd.f32 %v1231, %v1300
    %v1302 = vpop.f32.mrb[0].mxu0
    %1303 = vdwg.mxu0
    %1304 = vmatprep.subr.mxu0 0.0
    %1305 = vmatpush1.msra.mxu0 %v370
    %1306 = vmatprep.subr.mxu0 0.0
    %1307 = vmatpush1.msra.mxu0 %v371
    %1308 = vmatprep.subr.mxu0 0.0
    %1309 = vmatpush1.msra.mxu0 %v372
    %1310 = vmatprep.subr.mxu0 0.0
    %1311 = vmatpush1.msra.mxu0 %v373
    %1312 = vmatprep.subr.mxu0 0.0
    %1313 = vmatpush1.msra.mxu0 %v374
    %1314 = vmatprep.subr.mxu0 0.0
    %1315 = vmatpush1.msra.mxu0 %v375
    %1316 = vmatprep.subr.mxu0 0.0
    %1317 = vmatpush1.msra.mxu0 %v376
    %1318 = vmatprep.subr.mxu0 0.0
    %1319 = vmatpush1.msra.mxu0 %v377
    %1320 = vmatprep.subr.mxu0 0.0
    %1321 = vmatpush1.msra.mxu0 %v378
    %1322 = vmatprep.subr.mxu0 0.0
    %1323 = vmatpush1.msra.mxu0 %v379
    %1324 = vmatprep.subr.mxu0 0.0
    %1325 = vmatpush1.msra.mxu0 %v380
    %1326 = vmatprep.subr.mxu0 0.0
    %1327 = vmatpush1.msra.mxu0 %v381
    %1328 = vmatprep.subr.mxu0 0.0
    %1329 = vmatpush1.msra.mxu0 %v382
    %1330 = vmatprep.subr.mxu0 0.0
    %1331 = vmatpush1.msra.mxu0 %v383
    %1332 = vmatprep.subr.mxu0 0.0
    %1333 = vmatpush1.msra.mxu0 %v384
    %1334 = vmatprep.subr.mxu0 0.0
    %1335 = vmatpush1.msra.mxu0 %v385
    %1336 = vmatprep.subr.mxu0 0.0
    %1337 = vmatpush1.msra.mxu0 %v386
    %1338 = vmatprep.subr.mxu0 0.0
    %1339 = vmatpush1.msra.mxu0 %v387
    %1340 = vmatprep.subr.mxu0 0.0
    %1341 = vmatpush1.msra.mxu0 %v388
    %1342 = vmatprep.subr.mxu0 0.0
    %1343 = vmatpush1.msra.mxu0 %v389
    %1344 = vmatprep.subr.mxu0 0.0
    %1345 = vmatpush1.msra.mxu0 %v390
    %1346 = vmatprep.subr.mxu0 0.0
    %1347 = vmatpush1.msra.mxu0 %v391
    %1348 = vmatprep.subr.mxu0 0.0
    %1349 = vmatpush1.msra.mxu0 %v392
    %1350 = vmatprep.subr.mxu0 0.0
    %1351 = vmatpush1.msra.mxu0 %v393
    %1352 = vmatprep.subr.mxu0 0.0
    %1353 = vmatpush1.msra.mxu0 %v394
    %1354 = vmatprep.subr.mxu0 0.0
    %1355 = vmatpush1.msra.mxu0 %v395
    %1356 = vmatprep.subr.mxu0 0.0
    %1357 = vmatpush1.msra.mxu0 %v396
    %1358 = vmatprep.subr.mxu0 0.0
    %1359 = vmatpush1.msra.mxu0 %v397
    %1360 = vmatprep.subr.mxu0 0.0
    %1361 = vmatpush1.msra.mxu0 %v398
    %1362 = vmatprep.subr.mxu0 0.0
    %1363 = vmatpush1.msra.mxu0 %v399
    %1364 = vmatprep.subr.mxu0 0.0
    %1365 = vmatpush1.msra.mxu0 %v400
    %1366 = vmatprep.subr.mxu0 0.0
    %1367 = vmatpush1.msra.mxu0 %v401
    %1368 = vmatprep.mubr.f32.mxu0 %v509
    %1369 = vmatmul.mubr.f32.gmra.mrb[0].mxu0 %v507
    %v1370 = vpop.f32.mrb[0].mxu0
    %v1371 = vadd.f32 %v1301, %v1370
    %v1372 = vpop.f32.mrb[0].mxu0
    %1373 = vdwg.mxu0
    %vm1374 = vcmask 17408
    %1375 = vst.msk [vmem:[#allocation2] sm:$0x3] %vm1374, %v1371
    // Predicated region
    $region10: #{categories_forward.1} parent=1 // pred_check
      _
    $region11: #{categories_forward.1} parent=1 // pred_check_branch
      %1377 = sbr.rel (0) target = $region13
    $region12: #{categories_forward.1} parent=1 // pred_region
      %s1379 = ssub.s32 32, 32
      %1380 = vsyncadd [#allocation3], %s1379
      %s1382 = sshll.u32 [#allocation2], 4
      %s1383 = int_to_ptr.vmem [resolvable:$true] %s1382
      %1385 = dma.vmem_to_hbm [thread:$0]  %s1383, 32, %s2, [#allocation3]
    $region13: #{categories_forward.1} parent=1 // pred_fallthru
      _
    // Predicated region
    $region14: #{categories_forward.1} parent=1 // pred_check
      _
    $region15: #{categories_forward.1} parent=1 // pred_check_branch
      %1387 = sbr.rel (0) target = $region17
    $region16: #{categories_forward.1} parent=1 // pred_region
      %1388 = dma.done [#allocation3], 32
    $region17: #{categories_forward.1} parent=1 // pred_fallthru
      _
    %1389 = vsyncpa [#allocation3], 1

</llo_original>
